<compile_context>
chip_gen: v5e
topology: v5e:2x2
jax: 0.10.0
libtpu: 0.0.40
codegen_flags: <defaults>
</compile_context>

<pallas_src>
import jax
import jax.numpy as jnp
from jax.experimental import pallas as pl
from jax.experimental.pallas import tpu as pltpu

LOG_SIG_MAX = 2.0
LOG_SIG_MIN = -20.0


def _round_up(x: int, m: int) -> int:
    return ((x + m - 1) // m) * m


# --------------------------------------------------------------------------- #
# Kernel                                                                      #
# --------------------------------------------------------------------------- #
def gaussian_policy_kernel(obs_ref,
                           w1_ref, b1_ref,
                           w2_ref, b2_ref,
                           wh_ref, bh_ref,
                           out_ref):
    # --- hidden MLP (num_layers = 2, ReLU), f32 accumulation on the MXU -----
    h = jnp.dot(obs_ref[...], w1_ref[...],
                preferred_element_type=jnp.float32) + b1_ref[...]
    h = jnp.maximum(h, 0.0)
    h = jnp.dot(h.astype(w2_ref.dtype), w2_ref[...],
                preferred_element_type=jnp.float32) + b2_ref[...]
    h = jnp.maximum(h, 0.0)

    # --- fused, lane-padded heads: one MXU push computes mean || log_std ----
    y = jnp.dot(h.astype(wh_ref.dtype), wh_ref[...],
                preferred_element_type=jnp.float32) + bh_ref[...]

    # Clamp only the log_std half (cols >= half); mean half passes through.
    # Pure VPU (iota + cmp + clip + select) -> one lane-dense unmasked store.
    half = out_ref.shape[-1] // 2
    col = jax.lax.broadcasted_iota(jnp.int32, y.shape, 1)
    y = jnp.where(col >= half, jnp.clip(y, LOG_SIG_MIN, LOG_SIG_MAX), y)
    out_ref[...] = y.astype(out_ref.dtype)


# --------------------------------------------------------------------------- #
# One-time parameter packing (hoisted out of the per-step hot path)           #
# --------------------------------------------------------------------------- #
def prepare_params(params, *, compute_dtype=jnp.bfloat16):
    """Pack raw (in, out)-layout params into kernel-ready, pre-cast arrays.

    Builds the fused lane-padded head weight/bias once:
      cols [0, act_pad)          -> mean head   (zeros beyond act)
      cols [act_pad, 2*act_pad)  -> log_std head (zeros beyond act)
    """
    f32 = jnp.float32
    obs_dim, hid = params["w1"].shape
    act = params["wm"].shape[1]
    act_pad = _round_up(act, 128)
    head_w = 2 * act_pad

    wh = jnp.zeros((hid, head_w), f32)
    wh = wh.at[:, :act].set(params["wm"].astype(f32))
    wh = wh.at[:, act_pad:act_pad + act].set(params["ws"].astype(f32))
    bh = jnp.zeros((1, head_w), f32)
    bh = bh.at[:, :act].set(params["bm"].astype(f32))
    bh = bh.at[:, act_pad:act_pad + act].set(params["bs"].astype(f32))

    cdt = jnp.dtype(compute_dtype)
    return {
        "w1": params["w1"].astype(cdt),
        "b1": params["b1"].astype(f32),
        "w2": params["w2"].astype(cdt),
        "b2": params["b2"].astype(f32),
        "wh": wh.astype(cdt),
        "bh": bh,
        "obs_dim": obs_dim,
        "hid": hid,
        "act": act,
        "act_pad": act_pad,
        "compute_dtype": cdt,
    }


# --------------------------------------------------------------------------- #
# Forward wrapper                                                             #
# --------------------------------------------------------------------------- #
def gaussian_policy_forward(obs, prep, *, block_b=1024, out_dtype=None):
    """Pallas forward. `obs` is [B, obs_dim]; returns (mean, log_std) each [B, act].

    `prep` is the output of prepare_params() (weights already packed & cast).
    """
    B, obs_dim = obs.shape
    assert obs_dim == prep["obs_dim"]
    hid, act, act_pad = prep["hid"], prep["act"], prep["act_pad"]
    head_w = 2 * act_pad
    cdt = prep["compute_dtype"]
    odt = jnp.dtype(out_dtype) if out_dtype is not None else cdt

    # --- balanced batch tiling (minimize padding waste) ----------------------
    n_tiles = pl.cdiv(B, block_b)
    # v7x: 2 TensorCores/chip — make sure the "parallel" batch axis has >= 2
    # grid steps when there is enough work, so the second core is not idle.
    if n_tiles == 1 and B >= 256:
        n_tiles = 2
    tb = _round_up(pl.cdiv(B, n_tiles), 8)
    b_pad = n_tiles * tb

    obs_c = obs.astype(cdt)
    if b_pad != B:
        obs_c = jnp.pad(obs_c, ((0, b_pad - B), (0, 0)))
    grid = (n_tiles,)

    # --- advisory cost estimate (matches real traffic after the changes) -----
    in_bytes = jnp.dtype(cdt).itemsize
    out_bytes = jnp.dtype(odt).itemsize
    w1, b1, w2, b2, wh, bh = (prep["w1"], prep["b1"], prep["w2"],
                              prep["b2"], prep["wh"], prep["bh"])
    flops = 2 * b_pad * (obs_dim * hid + hid * hid + hid * head_w)
    bytes_accessed = (b_pad * obs_dim * in_bytes
                      + (w1.size + w2.size + wh.size) * in_bytes
                      + (b1.size + b2.size + bh.size) * 4
                      + b_pad * head_w * out_bytes)

    const = lambda i: (0, 0)   # weights/biases resident across all grid steps

    out = pl.pallas_call(
        gaussian_policy_kernel,
        out_shape=jax.ShapeDtypeStruct((b_pad, head_w), odt),
        grid=grid,
        in_specs=[
            pl.BlockSpec((tb, obs_dim), lambda i: (i, 0)),
            pl.BlockSpec((obs_dim, hid), const),
            pl.BlockSpec((1, hid), const),
            pl.BlockSpec((hid, hid), const),
            pl.BlockSpec((1, hid), const),
            pl.BlockSpec((hid, head_w), const),
            pl.BlockSpec((1, head_w), const),
        ],
        # If writeback DMA is ever exposed on long grids (v6e), add
        # pipeline_mode=pl.Buffered(3) here (<1 MiB extra VMEM).
        out_specs=pl.BlockSpec((tb, head_w), lambda i: (i, 0)),
        compiler_params=pltpu.CompilerParams(
            dimension_semantics=("parallel",)),
        cost_estimate=pl.CostEstimate(
            flops=flops, transcendentals=0, bytes_accessed=bytes_accessed),
    )(obs_c, w1, b1, w2, b2, wh, bh)

    mean = out[:B, :act]
    log_std = out[:B, act_pad:act_pad + act]
    return mean, log_std


# --------------------------------------------------------------------------- #
# Init + pure-JAX reference                                                   #
# --------------------------------------------------------------------------- #
def init_params(key, obs_dim, hid_size, action_dim):
    """Orthogonal init (gain=1.0) + zero biases, matching weights_init_."""
    k1, k2, k3, k4 = jax.random.split(key, 4)
    ortho = jax.nn.initializers.orthogonal(scale=1.0)
    # Stored as (in, out) — transposed vs. PyTorch's (out, in).
    return {
        "w1": ortho(k1, (obs_dim, hid_size), jnp.float32),
        "b1": jnp.zeros((1, hid_size), jnp.float32),
        "w2": ortho(k2, (hid_size, hid_size), jnp.float32),
        "b2": jnp.zeros((1, hid_size), jnp.float32),
        "wm": ortho(k3, (hid_size, action_dim), jnp.float32),
        "bm": jnp.zeros((1, action_dim), jnp.float32),
        "ws": ortho(k4, (hid_size, action_dim), jnp.float32),
        "bs": jnp.zeros((1, action_dim), jnp.float32),
    }


def reference_forward(obs, p):
    """Pure-JAX f32 reference matching the PyTorch forward()."""
    h = jnp.maximum(obs @ p["w1"] + p["b1"], 0.0)
    h = jnp.maximum(h @ p["w2"] + p["b2"], 0.0)
    mean = h @ p["wm"] + p["bm"]
    log_std = jnp.clip(h @ p["ws"] + p["bs"], LOG_SIG_MIN, LOG_SIG_MAX)
    return mean, log_std


if __name__ == "__main__":
    # Small shapes consistent with the module: num_layers=2, hid_size=32.
    B, OBS_DIM, HID, ACT_DIM = 8, 16, 32, 8

    key = jax.random.PRNGKey(0)
    k_obs, k_params = jax.random.split(key)
    obs = jax.random.normal(k_obs, (B, OBS_DIM), dtype=jnp.float32)
    params = init_params(k_params, OBS_DIM, HID, ACT_DIM)
    ref_mean, ref_log_std = reference_forward(obs, params)

    # One-time packing (hoisted out of the hot path).
    prep_f32 = prepare_params(params, compute_dtype=jnp.float32)
    prep_bf16 = prepare_params(params, compute_dtype=jnp.bfloat16)

    # f32 compute + f32 output: tight numerical check.
    mean32, log_std32 = jax.block_until_ready(
        gaussian_policy_forward(obs, prep_f32))
    assert mean32.shape == (B, ACT_DIM) and log_std32.shape == (B, ACT_DIM)
    assert mean32.dtype == jnp.float32
    assert jnp.allclose(mean32, ref_mean, atol=1e-4, rtol=1e-4)
    assert jnp.allclose(log_std32, ref_log_std, atol=1e-4, rtol=1e-4)

    # Default bf16 compute + bf16 output (f32 accumulation): looser tolerance.
    mean, log_std = jax.block_until_ready(gaussian_policy_forward(obs, prep_bf16))
    assert mean.shape == (B, ACT_DIM) and log_std.shape == (B, ACT_DIM)
    assert mean.dtype == jnp.bfloat16
    assert jnp.allclose(mean.astype(jnp.float32), ref_mean, atol=5e-2, rtol=5e-2)
    assert jnp.allclose(log_std.astype(jnp.float32), ref_log_std, atol=5e-2, rtol=5e-2)
    assert float(log_std.max()) <= LOG_SIG_MAX
    assert float(log_std.min()) >= LOG_SIG_MIN

    # Exercise grid > 1 with a batch that is not a multiple of the tile
    # (balanced tiling: B=50, block_b=16 -> 4 tiles of 16 rows).
    B2 = 50
    obs2 = jax.random.normal(jax.random.PRNGKey(1), (B2, OBS_DIM), dtype=jnp.float32)
    m2, s2 = jax.block_until_ready(
        gaussian_policy_forward(obs2, prep_f32, block_b=16))
    rm2, rs2 = reference_forward(obs2, params)
    assert m2.shape == (B2, ACT_DIM) and s2.shape == (B2, ACT_DIM)
    assert jnp.allclose(m2, rm2, atol=1e-4, rtol=1e-4)
    assert jnp.allclose(s2, rs2, atol=1e-4, rtol=1e-4)

    # Exercise the forced >=2-step grid for large single-tile batches
    # (v7x megacore path): B=600 with block_b=1024 -> 2 tiles of 304 rows.
    B3 = 600
    obs3 = jax.random.normal(jax.random.PRNGKey(2), (B3, OBS_DIM), dtype=jnp.float32)
    m3, s3 = jax.block_until_ready(gaussian_policy_forward(obs3, prep_f32))
    rm3, rs3 = reference_forward(obs3, params)
    assert m3.shape == (B3, ACT_DIM) and s3.shape == (B3, ACT_DIM)
    assert jnp.allclose(m3, rm3, atol=1e-4, rtol=1e-4)
    assert jnp.allclose(s3, rs3, atol=1e-4, rtol=1e-4)

    print("KERNEL_OK")
</pallas_src>

<mosaic_0001>
module attributes {stable_mosaic.version = 11 : i64} {
  func.func @gaussian_policy_kernel(%arg0: i32, %arg1: memref<8x16xf32, #tpu.memory_space<vmem>>, %arg2: memref<16x32xf32, #tpu.memory_space<vmem>>, %arg3: memref<1x32xf32, #tpu.memory_space<vmem>>, %arg4: memref<32x32xf32, #tpu.memory_space<vmem>>, %arg5: memref<1x32xf32, #tpu.memory_space<vmem>>, %arg6: memref<32x256xf32, #tpu.memory_space<vmem>>, %arg7: memref<1x256xf32, #tpu.memory_space<vmem>>, %arg8: memref<8x256xf32, #tpu.memory_space<vmem>>) attributes {dimension_semantics = [#tpu.dimension_semantics<parallel>], iteration_bounds = array<i64: 1>, scalar_prefetch = 0 : i64, scratch_operands = 0 : i64, tpu.core_type = #tpu.core_type<tc>, window_params = [{transform_indices = @transform_0, window_bounds = array<i64: 8, 16>}, {pipeline_mode = #tpu.pipeline_mode<synchronous>, transform_indices = @transform_1, window_bounds = array<i64: 16, 32>}, {pipeline_mode = #tpu.pipeline_mode<synchronous>, transform_indices = @transform_2, window_bounds = array<i64: 1, 32>}, {pipeline_mode = #tpu.pipeline_mode<synchronous>, transform_indices = @transform_3, window_bounds = array<i64: 32, 32>}, {pipeline_mode = #tpu.pipeline_mode<synchronous>, transform_indices = @transform_4, window_bounds = array<i64: 1, 32>}, {pipeline_mode = #tpu.pipeline_mode<synchronous>, transform_indices = @transform_5, window_bounds = array<i64: 32, 256>}, {pipeline_mode = #tpu.pipeline_mode<synchronous>, transform_indices = @transform_6, window_bounds = array<i64: 1, 256>}, {transform_indices = @transform_7, window_bounds = array<i64: 8, 256>}]} {
    %c0 = arith.constant 0 : index
    %c0_0 = arith.constant 0 : index
    %0 = vector.load %arg1[%c0, %c0_0] : memref<8x16xf32, #tpu.memory_space<vmem>>, vector<8x16xf32>
    %c0_1 = arith.constant 0 : index
    %c0_2 = arith.constant 0 : index
    %1 = vector.load %arg2[%c0_1, %c0_2] : memref<16x32xf32, #tpu.memory_space<vmem>>, vector<16x32xf32>
    %cst = arith.constant dense<0.000000e+00> : vector<8x32xf32>
    %2 = tpu.matmul %0, %1, %cst {dimension_numbers = #tpu.dot_dimension_numbers<[1], [0], [0], [1], [0, 0, 1, 1], [], []>} : vector<8x16xf32>, vector<16x32xf32>, vector<8x32xf32> -> vector<8x32xf32>
    %c0_3 = arith.constant 0 : index
    %c0_4 = arith.constant 0 : index
    %3 = vector.load %arg3[%c0_3, %c0_4] : memref<1x32xf32, #tpu.memory_space<vmem>>, vector<1x32xf32>
    %4 = vector.broadcast %3 : vector<1x32xf32> to vector<8x32xf32>
    %5 = arith.addf %2, %4 : vector<8x32xf32>
    %cst_5 = arith.constant 0.000000e+00 : f32
    %6 = vector.broadcast %cst_5 : f32 to vector<8x32xf32>
    %7 = arith.maximumf %5, %6 : vector<8x32xf32>
    %c0_6 = arith.constant 0 : index
    %c0_7 = arith.constant 0 : index
    %8 = vector.load %arg4[%c0_6, %c0_7] : memref<32x32xf32, #tpu.memory_space<vmem>>, vector<32x32xf32>
    %cst_8 = arith.constant dense<0.000000e+00> : vector<8x32xf32>
    %9 = tpu.matmul %7, %8, %cst_8 {dimension_numbers = #tpu.dot_dimension_numbers<[1], [0], [0], [1], [0, 0, 1, 1], [], []>} : vector<8x32xf32>, vector<32x32xf32>, vector<8x32xf32> -> vector<8x32xf32>
    %c0_9 = arith.constant 0 : index
    %c0_10 = arith.constant 0 : index
    %10 = vector.load %arg5[%c0_9, %c0_10] : memref<1x32xf32, #tpu.memory_space<vmem>>, vector<1x32xf32>
    %11 = vector.broadcast %10 : vector<1x32xf32> to vector<8x32xf32>
    %12 = arith.addf %9, %11 : vector<8x32xf32>
    %cst_11 = arith.constant 0.000000e+00 : f32
    %13 = vector.broadcast %cst_11 : f32 to vector<8x32xf32>
    %14 = arith.maximumf %12, %13 : vector<8x32xf32>
    %c0_12 = arith.constant 0 : index
    %c0_13 = arith.constant 0 : index
    %15 = vector.load %arg6[%c0_12, %c0_13] : memref<32x256xf32, #tpu.memory_space<vmem>>, vector<32x256xf32>
    %cst_14 = arith.constant dense<0.000000e+00> : vector<8x256xf32>
    %16 = tpu.matmul %14, %15, %cst_14 {dimension_numbers = #tpu.dot_dimension_numbers<[1], [0], [0], [1], [0, 0, 1, 1], [], []>} : vector<8x32xf32>, vector<32x256xf32>, vector<8x256xf32> -> vector<8x256xf32>
    %c0_15 = arith.constant 0 : index
    %c0_16 = arith.constant 0 : index
    %17 = vector.load %arg7[%c0_15, %c0_16] : memref<1x256xf32, #tpu.memory_space<vmem>>, vector<1x256xf32>
    %18 = vector.broadcast %17 : vector<1x256xf32> to vector<8x256xf32>
    %19 = arith.addf %16, %18 : vector<8x256xf32>
    %20 = tpu.iota {dimensions = array<i32: 1>} : vector<8x256xi32>
    %c128_i32 = arith.constant 128 : i32
    %21 = vector.broadcast %c128_i32 : i32 to vector<8x256xi32>
    %22 = arith.cmpi sge, %20, %21 : vector<8x256xi32>
    %cst_17 = arith.constant -2.000000e+01 : f32
    %cst_18 = arith.constant 2.000000e+00 : f32
    %23 = vector.broadcast %cst_17 : f32 to vector<8x256xf32>
    %24 = arith.maximumf %23, %19 : vector<8x256xf32>
    %25 = vector.broadcast %cst_18 : f32 to vector<8x256xf32>
    %26 = arith.minimumf %25, %24 : vector<8x256xf32>
    %27 = arith.select %22, %26, %19 : vector<8x256xi1>, vector<8x256xf32>
    %c0_19 = arith.constant 0 : index
    %c0_20 = arith.constant 0 : index
    %28 = vector.load %arg8[%c0_19, %c0_20] : memref<8x256xf32, #tpu.memory_space<vmem>>, vector<8x256xf32>
    tpu.vector_store %arg8[%c0_19, %c0_20], %27 {strides = array<i32>} : memref<8x256xf32, #tpu.memory_space<vmem>>, vector<8x256xf32>,
    return
  }
  func.func @transform_0(%arg0: i32) -> (i32, i32) {
    %c0_i32 = arith.constant 0 : i32
    %c0_i32_0 = arith.constant 0 : i32
    return %arg0, %c0_i32 : i32, i32
  }
  func.func @transform_1(%arg0: i32) -> (i32, i32) {
    %c0_i32 = arith.constant 0 : i32
    %c0_i32_0 = arith.constant 0 : i32
    %c0_i32_1 = arith.constant 0 : i32
    return %c0_i32, %c0_i32_0 : i32, i32
  }
  func.func @transform_2(%arg0: i32) -> (i32, i32) {
    %c0_i32 = arith.constant 0 : i32
    %c0_i32_0 = arith.constant 0 : i32
    %c0_i32_1 = arith.constant 0 : i32
    return %c0_i32, %c0_i32_0 : i32, i32
  }
  func.func @transform_3(%arg0: i32) -> (i32, i32) {
    %c0_i32 = arith.constant 0 : i32
    %c0_i32_0 = arith.constant 0 : i32
    %c0_i32_1 = arith.constant 0 : i32
    return %c0_i32, %c0_i32_0 : i32, i32
  }
  func.func @transform_4(%arg0: i32) -> (i32, i32) {
    %c0_i32 = arith.constant 0 : i32
    %c0_i32_0 = arith.constant 0 : i32
    %c0_i32_1 = arith.constant 0 : i32
    return %c0_i32, %c0_i32_0 : i32, i32
  }
  func.func @transform_5(%arg0: i32) -> (i32, i32) {
    %c0_i32 = arith.constant 0 : i32
    %c0_i32_0 = arith.constant 0 : i32
    %c0_i32_1 = arith.constant 0 : i32
    return %c0_i32, %c0_i32_0 : i32, i32
  }
  func.func @transform_6(%arg0: i32) -> (i32, i32) {
    %c0_i32 = arith.constant 0 : i32
    %c0_i32_0 = arith.constant 0 : i32
    %c0_i32_1 = arith.constant 0 : i32
    return %c0_i32, %c0_i32_0 : i32, i32
  }
  func.func @transform_7(%arg0: i32) -> (i32, i32) {
    %c0_i32 = arith.constant 0 : i32
    %c0_i32_0 = arith.constant 0 : i32
    return %arg0, %c0_i32 : i32, i32
  }
}

</mosaic_0001>

<llo_original>
// kernel: tpu_custom_call.1
$region0: #{tpu_custom_call.1}
  #allocation0 [shape = 'u32[]', space=smem, size = 0x4, offset = 0x4, fixed_abs, tag = 'smem constant byte address 0x4 - core index']
  #allocation1 [shape = 'u32[72,128]{1,0:T(1,128)}', space=vmem, size = 0x9000, scoped, tag = 'internal scratch']
  %s0 = inlined_call_operand.hbm [shape: f32[8,16], index: 0, kind: input, shape index: {}]
  %s1 = inlined_call_operand.hbm [shape: f32[16,32], index: 1, kind: input, shape index: {}]
  %s2 = inlined_call_operand.vmem [shape: f32[1,32], index: 2, kind: input, shape index: {}]
  %s3 = inlined_call_operand.hbm [shape: f32[32,32], index: 3, kind: input, shape index: {}]
  %s4 = inlined_call_operand.hbm [shape: f32[1,32], index: 4, kind: input, shape index: {}]
  %s5 = inlined_call_operand.hbm [shape: f32[32,256], index: 5, kind: input, shape index: {}]
  %s6 = inlined_call_operand.vmem [shape: f32[1,256], index: 6, kind: input, shape index: {}]
  %s7 = inlined_call_operand.hbm [shape: f32[8,256], index: 7, kind: output, shape index: {}]
  %s8 = sld [smem:[#allocation0]]
  $region58: #{tpu_custom_call.1} parent=0
    _
  %s10 = ssub.s32 1, %s8
  %s11 = scalar_select 0, %s10, %s8
  $region1: #{tpu_custom_call.1} parent=0
    #allocation2 [shape = 'u8[4096]{0}', space=vmem, size = 0x1000, scoped, tag = 'input window, operand 0, single buffered']
    #allocation3 [shape = 's32[1]{0}', space=sflag, size = 0x4, scoped, tag = 'scoped memory for tpu_custom_call.1']
    #allocation4 [shape = 's32[1]{0}', space=sflag, size = 0x4, scoped, tag = 'scoped memory for tpu_custom_call.1']
    #allocation5 [shape = 'u8[8192]{0}', space=vmem, size = 0x2000, scoped, tag = 'input window, operand 1, single buffered']
    #allocation6 [shape = 's32[1]{0}', space=sflag, size = 0x4, scoped, tag = 'scoped memory for tpu_custom_call.1']
    #allocation7 [shape = 'u8[16384]{0}', space=vmem, size = 0x4000, scoped, tag = 'input window, operand 3, single buffered']
    #allocation8 [shape = 'u8[512]{0}', space=vmem, size = 0x400, scoped, tag = 'input window, operand 4, single buffered']
    #allocation9 [shape = 's32[1]{0}', space=sflag, size = 0x4, scoped, tag = 'scoped memory for tpu_custom_call.1']
    #allocation10 [shape = 'u8[32768]{0}', space=vmem, size = 0x8000, scoped, tag = 'input window, operand 5, single buffered']
    #allocation11 [shape = 'u8[8192]{0}', space=vmem, size = 0x2000, scoped, tag = 'output window, operand 0, single buffered']
    %12 = vsyncpa [#allocation3], 0
    %13 = vsyncpa [#allocation6], 0
    %14 = vsyncpa [#allocation9], 0
    %15 = vsyncpa [#allocation4], 0
    // Predicated region
    $region2: #{tpu_custom_call.1} parent=1 // pred_check
      _
    $region3: #{tpu_custom_call.1} parent=1 // pred_check_branch
      %17 = sbr.rel (0) target = $region5
    $region4: #{tpu_custom_call.1} parent=1 // pred_region
      %19 = vsyncadd [#allocation3], 0
      %s21 = sshll.u32 %s0, 4
      %s22 = int_to_ptr.hbm [resolvable:$true] %s21
      %s23 = sshll.u32 [#allocation2], 4
      %s24 = int_to_ptr.vmem [resolvable:$true] %s23
      %26 = dma.hbm_to_vmem [thread:$0]  %s22, 128, %s24, [#allocation3]
    $region5: #{tpu_custom_call.1} parent=1 // pred_fallthru
      _
    // Predicated region
    $region6: #{tpu_custom_call.1} parent=1 // pred_check
      _
    $region7: #{tpu_custom_call.1} parent=1 // pred_check_branch
      %28 = sbr.rel (0) target = $region9
    $region8: #{tpu_custom_call.1} parent=1 // pred_region
      %30 = vsyncadd [#allocation6], 0
      %s31 = sshll.u32 %s1, 4
      %s32 = int_to_ptr.hbm [resolvable:$true] %s31
      %s33 = sshll.u32 [#allocation5], 4
      %s34 = int_to_ptr.vmem [resolvable:$true] %s33
      %39 = dma.hbm_to_vmem [thread:$0]  %s32, 256, %s34, [#allocation6], 128, 128, 8
    $region9: #{tpu_custom_call.1} parent=1 // pred_fallthru
      _
    // Predicated region
    $region10: #{tpu_custom_call.1} parent=1 // pred_check
      _
    $region11: #{tpu_custom_call.1} parent=1 // pred_check_branch
      %41 = sbr.rel (0) target = $region13
    $region12: #{tpu_custom_call.1} parent=1 // pred_region
      _
    $region13: #{tpu_custom_call.1} parent=1 // pred_fallthru
      _
    // Predicated region
    $region14: #{tpu_custom_call.1} parent=1 // pred_check
      _
    $region15: #{tpu_custom_call.1} parent=1 // pred_check_branch
      %43 = sbr.rel (0) target = $region17
    $region16: #{tpu_custom_call.1} parent=1 // pred_region
      %45 = vsyncadd [#allocation6], 0
      %s46 = sshll.u32 %s3, 4
      %s47 = int_to_ptr.hbm [resolvable:$true] %s46
      %s48 = sshll.u32 [#allocation7], 4
      %s49 = int_to_ptr.vmem [resolvable:$true] %s48
      %54 = dma.hbm_to_vmem [thread:$0]  %s47, 512, %s49, [#allocation6], 128, 128, 8
    $region17: #{tpu_custom_call.1} parent=1 // pred_fallthru
      _
    // Predicated region
    $region18: #{tpu_custom_call.1} parent=1 // pred_check
      _
    $region19: #{tpu_custom_call.1} parent=1 // pred_check_branch
      %56 = sbr.rel (0) target = $region21
    $region20: #{tpu_custom_call.1} parent=1 // pred_region
      %58 = vsyncadd [#allocation9], 0
      %s60 = sshll.u32 %s4, 4
      %s61 = int_to_ptr.hbm [resolvable:$true] %s60
      %s62 = sshll.u32 [#allocation8], 4
      %s63 = int_to_ptr.vmem [resolvable:$true] %s62
      %65 = dma.hbm_to_vmem [thread:$0]  %s61, 16, %s63, [#allocation9]
    $region21: #{tpu_custom_call.1} parent=1 // pred_fallthru
      _
    // Predicated region
    $region22: #{tpu_custom_call.1} parent=1 // pred_check
      _
    $region23: #{tpu_custom_call.1} parent=1 // pred_check_branch
      %67 = sbr.rel (0) target = $region25
    $region24: #{tpu_custom_call.1} parent=1 // pred_region
      %69 = vsyncadd [#allocation9], 0
      %s70 = sshll.u32 %s5, 4
      %s71 = int_to_ptr.hbm [resolvable:$true] %s70
      %s72 = sshll.u32 [#allocation10], 4
      %s73 = int_to_ptr.vmem [resolvable:$true] %s72
      %78 = dma.hbm_to_vmem [thread:$0]  %s71, 1024, %s73, [#allocation9], 256, 256, 16
    $region25: #{tpu_custom_call.1} parent=1 // pred_fallthru
      _
    // Predicated region
    $region26: #{tpu_custom_call.1} parent=1 // pred_check
      _
    $region27: #{tpu_custom_call.1} parent=1 // pred_check_branch
      %80 = sbr.rel (0) target = $region29
    $region28: #{tpu_custom_call.1} parent=1 // pred_region
      _
    $region29: #{tpu_custom_call.1} parent=1 // pred_fallthru
      _
    // Predicated region
    $region30: #{tpu_custom_call.1} parent=1 // pred_check
      _
    $region31: #{tpu_custom_call.1} parent=1 // pred_check_branch
      %82 = sbr.rel (0) target = $region33
    $region32: #{tpu_custom_call.1} parent=1 // pred_region
      %84 = dma.done [#allocation3], 128
    $region33: #{tpu_custom_call.1} parent=1 // pred_fallthru
      _
    // Predicated region
    $region34: #{tpu_custom_call.1} parent=1 // pred_check
      _
    $region35: #{tpu_custom_call.1} parent=1 // pred_check_branch
      %86 = sbr.rel (0) target = $region37
    $region36: #{tpu_custom_call.1} parent=1 // pred_region
      %88 = dma.done [#allocation6], 256
    $region37: #{tpu_custom_call.1} parent=1 // pred_fallthru
      _
    // Predicated region
    $region38: #{tpu_custom_call.1} parent=1 // pred_check
      _
    $region39: #{tpu_custom_call.1} parent=1 // pred_check_branch
      %90 = sbr.rel (0) target = $region41
    $region40: #{tpu_custom_call.1} parent=1 // pred_region
      %92 = dma.done [#allocation6], 512
    $region41: #{tpu_custom_call.1} parent=1 // pred_fallthru
      _
    // Predicated region
    $region42: #{tpu_custom_call.1} parent=1 // pred_check
      _
    $region43: #{tpu_custom_call.1} parent=1 // pred_check_branch
      %94 = sbr.rel (0) target = $region45
    $region44: #{tpu_custom_call.1} parent=1 // pred_region
      %96 = dma.done [#allocation9], 16
    $region45: #{tpu_custom_call.1} parent=1 // pred_fallthru
      _
    // Predicated region
    $region46: #{tpu_custom_call.1} parent=1 // pred_check
      _
    $region47: #{tpu_custom_call.1} parent=1 // pred_check_branch
      %98 = sbr.rel (0) target = $region49
    $region48: #{tpu_custom_call.1} parent=1 // pred_region
      %100 = dma.done [#allocation9], 1024
    $region49: #{tpu_custom_call.1} parent=1 // pred_fallthru
      _
    %v101 = vld [vmem:[#allocation2] sm:$0xff]
    %v102 = vld [vmem:[#allocation5] sm:$0xff]
    %v103 = vld [vmem:[#allocation5 + $0x8] sm:$0xff]
    %v104 = vld [vmem:[%s2] sm:$0x1]
    %v106 = vperm.slane %v104, 0
    %vm108 = vcmask 130048
    %v110 = vsel %vm108, %v101, 0
    %112 = vmatpush.msra.mxu0 0.0
    %113 = vmatpush.msra.mxu0 0.0
    %114 = vmatpush.msra.mxu0 0.0
    %115 = vmatpush.msra.mxu0 0.0
    %116 = vmatpush.msra.mxu0 0.0
    %117 = vmatpush.msra.mxu0 0.0
    %118 = vmatpush.msra.mxu0 0.0
    %119 = vmatpush.msra.mxu0 0.0
    %120 = vmatpush.msra.mxu0 0.0
    %121 = vmatpush.msra.mxu0 0.0
    %122 = vmatpush.msra.mxu0 0.0
    %123 = vmatpush.msra.mxu0 0.0
    %124 = vmatpush.msra.mxu0 0.0
    %125 = vmatpush.msra.mxu0 0.0
    %126 = vmatpush.msra.mxu0 %v103
    %127 = vmatpush.msra.mxu0 %v102
    %128 = vmatmul.f32.gmra.mxu0 %v110
    %v129 = vpop.f32.mrf.mxu0
    %v130 = vadd.f32 %v106, %v129
    %131 = vdwg.mxu0
    %v132 = vmax.f32 %v130, 0.0
    %v133 = vld [vmem:[#allocation7] sm:$0xff]
    %v134 = vld [vmem:[#allocation7 + $0x8] sm:$0xff]
    %v135 = vld [vmem:[#allocation7 + $0x10] sm:$0xff]
    %v136 = vld [vmem:[#allocation7 + $0x18] sm:$0xff]
    %v137 = vld [vmem:[#allocation8] sm:$0x1]
    %v139 = vperm.slane %v137, 0
    %vm141 = vcmask 261120
    %v143 = vsel %vm141, %v132, 0
    %145 = vmatpush.msra.mxu0 0.0
    %146 = vmatpush.msra.mxu0 0.0
    %147 = vmatpush.msra.mxu0 0.0
    %148 = vmatpush.msra.mxu0 0.0
    %149 = vmatpush.msra.mxu0 0.0
    %150 = vmatpush.msra.mxu0 0.0
    %151 = vmatpush.msra.mxu0 0.0
    %152 = vmatpush.msra.mxu0 0.0
    %153 = vmatpush.msra.mxu0 0.0
    %154 = vmatpush.msra.mxu0 0.0
    %155 = vmatpush.msra.mxu0 0.0
    %156 = vmatpush.msra.mxu0 0.0
    %157 = vmatpush.msra.mxu0 %v136
    %158 = vmatpush.msra.mxu0 %v135
    %159 = vmatpush.msra.mxu0 %v134
    %160 = vmatpush.msra.mxu0 %v133
    %161 = vmatmul.f32.gmra.mxu0 %v143
    %v162 = vpop.f32.mrf.mxu0
    %v163 = vadd.f32 %v139, %v162
    %164 = vdwg.mxu0
    %v165 = vmax.f32 %v163, 0.0
    %v166 = vld [vmem:[#allocation10] sm:$0xff]
    %v167 = vld [vmem:[#allocation10 + $0x8] sm:$0xff]
    %v168 = vld [vmem:[#allocation10 + $0x10] sm:$0xff]
    %v169 = vld [vmem:[#allocation10 + $0x18] sm:$0xff]
    %v170 = vld [vmem:[#allocation10 + $0x20] sm:$0xff]
    %v171 = vld [vmem:[#allocation10 + $0x28] sm:$0xff]
    %v172 = vld [vmem:[#allocation10 + $0x30] sm:$0xff]
    %v173 = vld [vmem:[#allocation10 + $0x38] sm:$0xff]
    %v174 = vld [vmem:[%s6] sm:$0x3]
    %v176 = vperm.slane %v174, 0
    %v177 = vperm.slane %v174, 1
    %v181 = vsel %vm141, %v165, 0
    %183 = vmatpush.msra.mxu0 0.0
    %184 = vmatpush.msra.mxu0 0.0
    %185 = vmatpush.msra.mxu0 0.0
    %186 = vmatpush.msra.mxu0 0.0
    %187 = vmatpush.msra.mxu0 0.0
    %188 = vmatpush.msra.mxu0 0.0
    %189 = vmatpush.msra.mxu0 0.0
    %190 = vmatpush.msra.mxu0 0.0
    %191 = vmatpush.msra.mxu0 0.0
    %192 = vmatpush.msra.mxu0 0.0
    %193 = vmatpush.msra.mxu0 0.0
    %194 = vmatpush.msra.mxu0 0.0
    %195 = vmatpush.msra.mxu0 %v172
    %196 = vmatpush.msra.mxu0 %v170
    %197 = vmatpush.msra.mxu0 %v168
    %198 = vmatpush.msra.mxu0 %v166
    %199 = vmatmul.f32.gmra.mxu0 %v181
    %v200 = vpop.f32.mrf.mxu0
    %v201 = vadd.f32 %v176, %v200
    %202 = vdwg.mxu0
    %203 = vmatpush.msra.mxu0 0.0
    %204 = vmatpush.msra.mxu0 0.0
    %205 = vmatpush.msra.mxu0 0.0
    %206 = vmatpush.msra.mxu0 0.0
    %207 = vmatpush.msra.mxu0 0.0
    %208 = vmatpush.msra.mxu0 0.0
    %209 = vmatpush.msra.mxu0 0.0
    %210 = vmatpush.msra.mxu0 0.0
    %211 = vmatpush.msra.mxu0 0.0
    %212 = vmatpush.msra.mxu0 0.0
    %213 = vmatpush.msra.mxu0 0.0
    %214 = vmatpush.msra.mxu0 0.0
    %215 = vmatpush.msra.mxu0 %v173
    %216 = vmatpush.msra.mxu0 %v171
    %217 = vmatpush.msra.mxu0 %v169
    %218 = vmatpush.msra.mxu0 %v167
    %219 = vmatmul.f32.gmra.mxu0 %v181
    %v220 = vpop.f32.mrf.mxu0
    %v221 = vadd.f32 %v177, %v220
    %222 = vdwg.mxu0
    %v223 = vlaneseq
    %v224 = vand.u32 %v223, 127
    %v225 = vadd.s32 %v224, 128
    %vm226 = vcmp.ge.s32.totalorder %v224, 128
    %vm227 = vcmp.ge.s32.totalorder %v225, 128
    %v228 = vmax.f32 %v201, -20.0
    %v229 = vmax.f32 %v221, -20.0
    %v230 = vmin.f32 %v228, 2.0
    %v231 = vmin.f32 %v229, 2.0
    %v232 = vsel %vm226, %v230, %v201
    %v233 = vsel %vm227, %v231, %v221
    %234 = vst [vmem:[#allocation11] sm:$0xff] %v232
    %235 = vst [vmem:[#allocation11 + $0x8] sm:$0xff] %v233
    // Predicated region
    $region50: #{tpu_custom_call.1} parent=1 // pred_check
      _
    $region51: #{tpu_custom_call.1} parent=1 // pred_check_branch
      %237 = sbr.rel (0) target = $region53
    $region52: #{tpu_custom_call.1} parent=1 // pred_region
      %239 = vsyncadd [#allocation4], 0
      %s241 = sshll.u32 [#allocation11], 4
      %s242 = int_to_ptr.vmem [resolvable:$true] %s241
      %s243 = sshll.u32 %s7, 4
      %s244 = int_to_ptr.hbm [resolvable:$true] %s243
      %246 = dma.vmem_to_hbm [thread:$0]  %s242, 256, %s244, [#allocation4]
    $region53: #{tpu_custom_call.1} parent=1 // pred_fallthru
      _
    // Predicated region
    $region54: #{tpu_custom_call.1} parent=1 // pred_check
      _
    $region55: #{tpu_custom_call.1} parent=1 // pred_check_branch
      %248 = sbr.rel (0) target = $region57
    $region56: #{tpu_custom_call.1} parent=1 // pred_region
      %250 = dma.done [#allocation4], 256
    $region57: #{tpu_custom_call.1} parent=1 // pred_fallthru
      _
    %251 = vsyncpa [#allocation3], 1
    %252 = vsyncpa [#allocation6], 1
    %253 = vsyncpa [#allocation9], 1
    %254 = vsyncpa [#allocation4], 1

</llo_original>
